<compile_context>
chip_gen: v5e
topology: v5e:2x2
jax: 0.10.0
libtpu: 0.0.40
codegen_flags: <defaults>
</compile_context>

<pallas_src>
import math

import jax
import jax.numpy as jnp
from jax.experimental import pallas as pl
from jax.experimental.pallas import tpu as pltpu

EPS = 1e-5           # InstanceNorm1d default eps
NEG_SLOPE = 0.2      # LeakyReLU(0.2)
INV_SQRT2 = 1.0 / math.sqrt(2.0)


# ----------------------------- kernel helpers --------------------------------


def _adain_lrelu(x, g, b):
    """Fused AdaIN + LeakyReLU(0.2) in f32, single reduction pass.

    x: (C, T) f32.  g/b: (C, 1) f32 = style gamma/beta with the InstanceNorm
    affine params already folded in by the wrapper:
        g = (1+gamma)*in_weight,  b = (1+gamma)*in_bias + beta.
    Uses var = E[x^2] - mean^2 (clamped) so only two lane reductions run, and
    folds normalize+affine into one x*a + c pass.
    """
    mean = jnp.mean(x, axis=1, keepdims=True)            # (C, 1)
    meansq = jnp.mean(x * x, axis=1, keepdims=True)      # (C, 1)
    var = jnp.maximum(meansq - mean * mean, 0.0)         # biased var (PyTorch IN)
    rstd = jax.lax.rsqrt(var + EPS)
    a = g * rstd                                         # per-channel scale
    c = b - mean * a                                     # per-channel shift
    y = x * a + c
    return jnp.where(y >= 0, y, NEG_SLOPE * y)


def _conv3(xc, w_stack, bias, left_mask, right_mask):
    """Conv1d(kernel=3, stride=1, padding=1) in (C, T) layout, fused taps.

    w_stack: (3*Cout, Cin) with rows [k*Cout:(k+1)*Cout] = torch_weight[:, :, k]
    so a single MXU matmul produces all three tap outputs.  The time shifts are
    applied to the matmul *outputs* via pltpu.roll (XLU, no concatenate
    copies); the wrapped edge column of each rolled term is re-zeroed with the
    precomputed masks so Conv1d zero-padding semantics hold at t=0 / t=T-1.
    Accumulates into a single (Cout, T) f32 buffer.
    """
    y = jnp.dot(w_stack, xc, preferred_element_type=jnp.float32)   # (3*Cout, T)
    Cout = y.shape[0] // 3
    T = y.shape[1]
    acc = y[Cout:2 * Cout] + bias                                   # centre tap
    acc = acc + left_mask * pltpu.roll(y[:Cout], shift=1, axis=1)           # x[t-1]
    acc = acc + right_mask * pltpu.roll(y[2 * Cout:3 * Cout], shift=T - 1, axis=1)  # x[t+1]
    return acc


def adain_resblk1d_kernel(x_ref, gb_ref, c1w_ref, c1b_ref, c2w_ref, c2b_ref,
                          scw_ref, o_ref):
    cdt = c1w_ref.dtype                      # matmul/storage dtype (bf16 or f32)
    Bb, Cin, T = x_ref.shape
    Cout = o_ref.shape[1]

    # Edge masks for conv zero-padding: computed ONCE, reused by both convs
    # and all batch items in this block.
    col = jax.lax.broadcasted_iota(jnp.int32, (1, T), 1)
    left_mask = (col != 0).astype(jnp.float32)
    right_mask = (col != T - 1).astype(jnp.float32)

    c1w = c1w_ref[...]
    c2w = c2w_ref[...]
    scw = scw_ref[...]
    c1b = c1b_ref[...]
    c2b = c2b_ref[...]

    for i in range(Bb):                      # static unroll over small batch block
        xi = x_ref[i]                        # (Cin, T) in matmul dtype
        gb = gb_ref[i]                       # (2*(Cin+Cout), 1) f32, packed params
        g1 = gb[0:Cin]
        b1 = gb[Cin:2 * Cin]
        g2 = gb[2 * Cin:2 * Cin + Cout]
        b2 = gb[2 * Cin + Cout:2 * (Cin + Cout)]

        # residual branch (pool = Identity, dropout = identity in eval)
        h = _adain_lrelu(xi.astype(jnp.float32), g1, b1)
        h = _conv3(h.astype(cdt), c1w, c1b, left_mask, right_mask)   # (Cout, T) f32
        h = _adain_lrelu(h, g2, b2)
        h = _conv3(h.astype(cdt), c2w, c2b, left_mask, right_mask)   # (Cout, T) f32

        # learned shortcut: bias-free weight-normed 1x1 conv
        sc = jnp.dot(scw, xi, preferred_element_type=jnp.float32)

        o_ref[i] = ((h + sc) * INV_SQRT2).astype(o_ref.dtype)        # fused write


# ----------------------------- wrapper ---------------------------------------


def _pick_vmem_limit():
    """Per-generation VMEM budget (leave headroom below physical)."""
    kind = ""
    try:
        kind = jax.devices()[0].device_kind.lower()
    except Exception:
        pass
    if "v7" in kind:
        return 48 * 1024 * 1024    # 64 MiB physical on v7x
    if "v6" in kind:
        return 96 * 1024 * 1024    # 128 MiB physical on v6e
    if "v5" in kind:
        return 64 * 1024 * 1024    # 128 MiB physical on v5e (default scoped is 16)
    return 48 * 1024 * 1024        # conservative fallback


def adain_resblk1d(x, s, p, *, matmul_dtype=jnp.bfloat16, out_dtype=None,
                   batch_block=1, vmem_limit_bytes=None):
    """x: (B, Cin, T) NCW, s: (B, S). Returns (B, Cout, T) NCW (no transposes)."""
    B, Cin, T = x.shape
    Cout = p["c1_w"].shape[0]
    assert T >= 2, "shift-after-matmul edge handling assumes T >= 2"
    assert B % batch_block == 0, "batch_block must divide B"
    if out_dtype is None:
        out_dtype = x.dtype
    if vmem_limit_bytes is None:
        vmem_limit_bytes = _pick_vmem_limit()

    sf = s.astype(jnp.float32)

    # Hoisted AdaIN style projection (tiny matmul, batched over B in XLA) and
    # folding of the InstanceNorm affine into effective scale/shift.
    def fold(fcw, fcb, nw, nb):
        h = sf @ fcw + fcb                        # (B, 2C)
        C = fcw.shape[1] // 2
        gamma, beta = h[:, :C], h[:, C:]
        g_eff = (1.0 + gamma) * nw                # (1+gamma) * IN_weight
        b_eff = (1.0 + gamma) * nb + beta         # (1+gamma) * IN_bias + beta
        return g_eff, b_eff                       # (B, C) each

    g1, b1 = fold(p["fc1_w"], p["fc1_b"], p["n1_w"], p["n1_b"])
    g2, b2 = fold(p["fc2_w"], p["fc2_b"], p["n2_w"], p["n2_b"])
    # Single packed per-batch parameter array -> one small DMA per grid step.
    gb = jnp.concatenate([g1, b1, g2, b2], axis=1).astype(jnp.float32)[:, :, None]

    # Fused-tap conv weights: (Cout, Cin, 3) -> (3*Cout, Cin), rows grouped by tap.
    def stack_taps(w):
        return jnp.concatenate([w[:, :, 0], w[:, :, 1], w[:, :, 2]], axis=0)

    # NOTE: x is stored/DMA'd in matmul_dtype; InstanceNorm stats are computed
    # from that (slightly different from f32 PyTorch IN when bf16 is used).
    xc = x.astype(matmul_dtype)
    c1w = stack_taps(p["c1_w"]).astype(matmul_dtype)
    c2w = stack_taps(p["c2_w"]).astype(matmul_dtype)
    scw = p["sc_w"][:, :, 0].astype(matmul_dtype)
    c1b = p["c1_b"].reshape(Cout, 1).astype(jnp.float32)
    c2b = p["c2_b"].reshape(Cout, 1).astype(jnp.float32)

    bb = batch_block

    def bcast(arr):
        nd = arr.ndim
        return pl.BlockSpec(arr.shape, lambda b, _n=nd: (0,) * _n)

    w_itemsize = jnp.dtype(matmul_dtype).itemsize
    cost = pl.CostEstimate(
        flops=2 * B * T * (3 * Cin * Cout + 3 * Cout * Cout + Cin * Cout),
        transcendentals=B * (Cin + Cout),
        bytes_accessed=int(
            xc.size * w_itemsize
            + B * Cout * T * jnp.dtype(out_dtype).itemsize
            + (c1w.size + c2w.size + scw.size) * w_itemsize
            + gb.size * 4 + (c1b.size + c2b.size) * 4),
    )

    out = pl.pallas_call(
        adain_resblk1d_kernel,
        out_shape=jax.ShapeDtypeStruct((B, Cout, T), out_dtype),
        grid=(B // bb,),
        in_specs=[
            pl.BlockSpec((bb, Cin, T), lambda b: (b, 0, 0)),               # x
            pl.BlockSpec((bb, 2 * (Cin + Cout), 1), lambda b: (b, 0, 0)),  # packed g/b
            bcast(c1w), bcast(c1b), bcast(c2w), bcast(c2b), bcast(scw),
        ],
        out_specs=pl.BlockSpec((bb, Cout, T), lambda b: (b, 0, 0)),
        compiler_params=pltpu.CompilerParams(
            dimension_semantics=("parallel",),
            vmem_limit_bytes=vmem_limit_bytes),
        cost_estimate=cost,
    )(xc, gb, c1w, c1b, c2w, c2b, scw)
    return out


# -------------------------- parameter init (synthetic) -----------------------


def _weight_norm_conv(key, cout, cin, k):
    # PyTorch weight_norm: w = g * v / ||v|| (norm over (cin, k) per out-channel)
    kv, kg = jax.random.split(key)
    v = 0.3 * jax.random.normal(kv, (cout, cin, k), jnp.float32)
    g = jax.random.uniform(kg, (cout, 1, 1), jnp.float32, minval=0.5, maxval=1.5)
    norm = jnp.sqrt(jnp.sum(v * v, axis=(1, 2), keepdims=True))
    return g * v / norm


def init_params(key, dim_in, dim_out, style_dim):
    ks = jax.random.split(key, 13)
    return {
        # AdaIN fc: nn.Linear(style_dim, 2*C); stored transposed (S, 2C)
        "fc1_w": 0.3 * jax.random.normal(ks[3], (style_dim, 2 * dim_in), jnp.float32),
        "fc1_b": 0.3 * jax.random.normal(ks[4], (2 * dim_in,), jnp.float32),
        "fc2_w": 0.3 * jax.random.normal(ks[5], (style_dim, 2 * dim_out), jnp.float32),
        "fc2_b": 0.3 * jax.random.normal(ks[6], (2 * dim_out,), jnp.float32),
        # InstanceNorm1d affine params (PyTorch init is 1/0; perturbed deterministically)
        "n1_w": 1.0 + 0.1 * jax.random.normal(ks[7], (dim_in,), jnp.float32),
        "n1_b": 0.1 * jax.random.normal(ks[8], (dim_in,), jnp.float32),
        "n2_w": 1.0 + 0.1 * jax.random.normal(ks[9], (dim_out,), jnp.float32),
        "n2_b": 0.1 * jax.random.normal(ks[10], (dim_out,), jnp.float32),
        # Conv weights kept in PyTorch layout (Cout, Cin, K); wrapper rearranges.
        "c1_w": _weight_norm_conv(ks[0], dim_out, dim_in, 3),
        "c1_b": 0.1 * jax.random.normal(ks[11], (dim_out,), jnp.float32),
        "c2_w": _weight_norm_conv(ks[1], dim_out, dim_out, 3),
        "c2_b": 0.1 * jax.random.normal(ks[12], (dim_out,), jnp.float32),
        "sc_w": _weight_norm_conv(ks[2], dim_out, dim_in, 1),   # 1x1 conv, bias=False
    }


# -------------------------- pure-JAX reference (f32) -------------------------


def reference(x, s, p):
    x = x.astype(jnp.float32)

    def adain(xin, fcw, fcb, nw, nb):
        C = xin.shape[1]
        h = s.astype(jnp.float32) @ fcw + fcb
        gamma, beta = h[:, :C, None], h[:, C:, None]
        mean = jnp.mean(xin, axis=2, keepdims=True)
        var = jnp.mean((xin - mean) ** 2, axis=2, keepdims=True)
        xn = (xin - mean) / jnp.sqrt(var + EPS)
        xn = xn * nw[None, :, None] + nb[None, :, None]
        return (1.0 + gamma) * xn + beta

    def lrelu(v):
        return jnp.where(v >= 0, v, NEG_SLOPE * v)

    def conv3(xin, w, b):
        T = xin.shape[2]
        xp = jnp.pad(xin, ((0, 0), (0, 0), (1, 1)))
        out = sum(jnp.einsum("oc,bct->bot", w[:, :, k], xp[:, :, k:k + T])
                  for k in range(3))
        return out + b[None, :, None]

    h = conv3(lrelu(adain(x, p["fc1_w"], p["fc1_b"], p["n1_w"], p["n1_b"])),
              p["c1_w"], p["c1_b"])
    h = conv3(lrelu(adain(h, p["fc2_w"], p["fc2_b"], p["n2_w"], p["n2_b"])),
              p["c2_w"], p["c2_b"])
    sc = jnp.einsum("oc,bct->bot", p["sc_w"][:, :, 0], x)
    return (h + sc) * INV_SQRT2


# ------------------------------------ main ------------------------------------

if __name__ == "__main__":
    # Small but TPU-aligned shapes: T multiple of 128 (lane-dense), C multiple of 8.
    B, dim_in, dim_out, T, style_dim = 2, 8, 16, 128, 64

    key = jax.random.PRNGKey(0)
    kx, ks_, kp = jax.random.split(key, 3)
    x = jax.random.normal(kx, (B, dim_in, T), jnp.float32)     # PyTorch NCW input
    s = jax.random.normal(ks_, (B, style_dim), jnp.float32)    # style vector
    params = init_params(kp, dim_in, dim_out, style_dim)

    ref = reference(x, s, params)
    scale = float(jnp.max(jnp.abs(ref)))

    # 1) f32 path, one batch item per grid step: checks kernel logic tightly.
    out_f32 = jax.block_until_ready(
        adain_resblk1d(x, s, params, matmul_dtype=jnp.float32,
                       out_dtype=jnp.float32, batch_block=1))
    assert out_f32.shape == (B, dim_out, T), out_f32.shape
    err_f32 = float(jnp.max(jnp.abs(out_f32 - ref)))
    assert err_f32 < 1e-3 * scale + 1e-4, f"f32 mismatch vs reference: {err_f32}"

    # 2) bf16 matmul operands + bf16 output + batched grid step (amortizes the
    #    per-step pipeline overhead at toy sizes); looser tolerance for bf16.
    out_bf16 = jax.block_until_ready(
        adain_resblk1d(x, s, params, matmul_dtype=jnp.bfloat16,
                       out_dtype=jnp.bfloat16, batch_block=B))
    assert out_bf16.shape == (B, dim_out, T), out_bf16.shape
    err_bf16 = float(jnp.max(jnp.abs(out_bf16.astype(jnp.float32) - ref)))
    assert err_bf16 < 0.05 * scale + 1e-2, f"bf16 mismatch: {err_bf16} (scale {scale})"

    print("KERNEL_OK")
</pallas_src>

<mosaic_0001>
module attributes {stable_mosaic.version = 11 : i64} {
  func.func @adain_resblk1d_kernel(%arg0: i32, %arg1: memref<1x8x128xf32, #tpu.memory_space<vmem>>, %arg2: memref<1x48x1xf32, #tpu.memory_space<vmem>>, %arg3: memref<48x8xf32, #tpu.memory_space<vmem>>, %arg4: memref<16x1xf32, #tpu.memory_space<vmem>>, %arg5: memref<48x16xf32, #tpu.memory_space<vmem>>, %arg6: memref<16x1xf32, #tpu.memory_space<vmem>>, %arg7: memref<16x8xf32, #tpu.memory_space<vmem>>, %arg8: memref<1x16x128xf32, #tpu.memory_space<vmem>>) attributes {dimension_semantics = [#tpu.dimension_semantics<parallel>], iteration_bounds = array<i64: 2>, scalar_prefetch = 0 : i64, scratch_operands = 0 : i64, tpu.core_type = #tpu.core_type<tc>, window_params = [{transform_indices = @transform_0, window_bounds = array<i64: 1, 8, 128>}, {transform_indices = @transform_1, window_bounds = array<i64: 1, 48, 1>}, {pipeline_mode = #tpu.pipeline_mode<synchronous>, transform_indices = @transform_2, window_bounds = array<i64: 48, 8>}, {pipeline_mode = #tpu.pipeline_mode<synchronous>, transform_indices = @transform_3, window_bounds = array<i64: 16, 1>}, {pipeline_mode = #tpu.pipeline_mode<synchronous>, transform_indices = @transform_4, window_bounds = array<i64: 48, 16>}, {pipeline_mode = #tpu.pipeline_mode<synchronous>, transform_indices = @transform_5, window_bounds = array<i64: 16, 1>}, {pipeline_mode = #tpu.pipeline_mode<synchronous>, transform_indices = @transform_6, window_bounds = array<i64: 16, 8>}, {transform_indices = @transform_7, window_bounds = array<i64: 1, 16, 128>}]} {
    %0 = tpu.iota {dimensions = array<i32: 1>} : vector<1x128xi32>
    %c0_i32 = arith.constant 0 : i32
    %1 = vector.broadcast %c0_i32 : i32 to vector<1x128xi32>
    %2 = arith.cmpi ne, %0, %1 : vector<1x128xi32>
    %3 = arith.extui %2 : vector<1x128xi1> to vector<1x128xi32>
    %4 = arith.sitofp %3 : vector<1x128xi32> to vector<1x128xf32>
    %c127_i32 = arith.constant 127 : i32
    %5 = vector.broadcast %c127_i32 : i32 to vector<1x128xi32>
    %6 = arith.cmpi ne, %0, %5 : vector<1x128xi32>
    %7 = arith.extui %6 : vector<1x128xi1> to vector<1x128xi32>
    %8 = arith.sitofp %7 : vector<1x128xi32> to vector<1x128xf32>
    %c0 = arith.constant 0 : index
    %c0_0 = arith.constant 0 : index
    %9 = vector.load %arg3[%c0, %c0_0] : memref<48x8xf32, #tpu.memory_space<vmem>>, vector<48x8xf32>
    %c0_1 = arith.constant 0 : index
    %c0_2 = arith.constant 0 : index
    %10 = vector.load %arg5[%c0_1, %c0_2] : memref<48x16xf32, #tpu.memory_space<vmem>>, vector<48x16xf32>
    %c0_3 = arith.constant 0 : index
    %c0_4 = arith.constant 0 : index
    %11 = vector.load %arg7[%c0_3, %c0_4] : memref<16x8xf32, #tpu.memory_space<vmem>>, vector<16x8xf32>
    %c0_5 = arith.constant 0 : index
    %c0_6 = arith.constant 0 : index
    %12 = vector.load %arg4[%c0_5, %c0_6] : memref<16x1xf32, #tpu.memory_space<vmem>>, vector<16x1xf32>
    %c0_7 = arith.constant 0 : index
    %c0_8 = arith.constant 0 : index
    %13 = vector.load %arg6[%c0_7, %c0_8] : memref<16x1xf32, #tpu.memory_space<vmem>>, vector<16x1xf32>
    %c0_9 = arith.constant 0 : index
    %c0_10 = arith.constant 0 : index
    %c0_11 = arith.constant 0 : index
    %14 = vector.load %arg1[%c0_9, %c0_10, %c0_11] : memref<1x8x128xf32, #tpu.memory_space<vmem>>, vector<1x8x128xf32>
    %15 = vector.shape_cast %14 : vector<1x8x128xf32> to vector<8x128xf32>
    %c0_12 = arith.constant 0 : index
    %c0_13 = arith.constant 0 : index
    %c0_14 = arith.constant 0 : index
    %16 = vector.load %arg2[%c0_12, %c0_13, %c0_14] : memref<1x48x1xf32, #tpu.memory_space<vmem>>, vector<1x48x1xf32>
    %17 = vector.shape_cast %16 : vector<1x48x1xf32> to vector<48x1xf32>
    %18 = vector.extract_strided_slice %17 {offsets = [0, 0], sizes = [8, 1], strides = [1, 1]} : vector<48x1xf32> to vector<8x1xf32>
    %19 = vector.extract_strided_slice %17 {offsets = [8, 0], sizes = [8, 1], strides = [1, 1]} : vector<48x1xf32> to vector<8x1xf32>
    %20 = vector.extract_strided_slice %17 {offsets = [16, 0], sizes = [16, 1], strides = [1, 1]} : vector<48x1xf32> to vector<16x1xf32>
    %21 = vector.extract_strided_slice %17 {offsets = [32, 0], sizes = [16, 1], strides = [1, 1]} : vector<48x1xf32> to vector<16x1xf32>
    %cst = arith.constant dense<0.000000e+00> : vector<8xf32>
    %22 = vector.multi_reduction <add>, %15, %cst [1] : vector<8x128xf32> to vector<8xf32>
    %23 = vector.shape_cast %22 : vector<8xf32> to vector<8x1xf32>
    %cst_15 = arith.constant 1.280000e+02 : f32
    %24 = vector.broadcast %cst_15 : f32 to vector<8x1xf32>
    %25 = arith.divf %23, %24 : vector<8x1xf32>
    %26 = arith.mulf %15, %15 : vector<8x128xf32>
    %cst_16 = arith.constant dense<0.000000e+00> : vector<8xf32>
    %27 = vector.multi_reduction <add>, %26, %cst_16 [1] : vector<8x128xf32> to vector<8xf32>
    %28 = vector.shape_cast %27 : vector<8xf32> to vector<8x1xf32>
    %cst_17 = arith.constant 1.280000e+02 : f32
    %29 = vector.broadcast %cst_17 : f32 to vector<8x1xf32>
    %30 = arith.divf %28, %29 : vector<8x1xf32>
    %31 = arith.mulf %25, %25 : vector<8x1xf32>
    %32 = arith.subf %30, %31 : vector<8x1xf32>
    %cst_18 = arith.constant 0.000000e+00 : f32
    %33 = vector.broadcast %cst_18 : f32 to vector<8x1xf32>
    %34 = arith.maximumf %32, %33 : vector<8x1xf32>
    %cst_19 = arith.constant 9.99999974E-6 : f32
    %35 = vector.broadcast %cst_19 : f32 to vector<8x1xf32>
    %36 = arith.addf %34, %35 : vector<8x1xf32>
    %37 = math.rsqrt %36 : vector<8x1xf32>
    %38 = arith.mulf %18, %37 : vector<8x1xf32>
    %39 = arith.mulf %25, %38 : vector<8x1xf32>
    %40 = arith.subf %19, %39 : vector<8x1xf32>
    %41 = vector.broadcast %38 : vector<8x1xf32> to vector<8x128xf32>
    %42 = arith.mulf %15, %41 : vector<8x128xf32>
    %43 = vector.broadcast %40 : vector<8x1xf32> to vector<8x128xf32>
    %44 = arith.addf %42, %43 : vector<8x128xf32>
    %cst_20 = arith.constant 0.000000e+00 : f32
    %45 = vector.broadcast %cst_20 : f32 to vector<8x128xf32>
    %46 = arith.cmpf oge, %44, %45 : vector<8x128xf32>
    %cst_21 = arith.constant 2.000000e-01 : f32
    %47 = vector.broadcast %cst_21 : f32 to vector<8x128xf32>
    %48 = arith.mulf %47, %44 : vector<8x128xf32>
    %49 = arith.select %46, %44, %48 : vector<8x128xi1>, vector<8x128xf32>
    %cst_22 = arith.constant dense<0.000000e+00> : vector<48x128xf32>
    %50 = tpu.matmul %9, %49, %cst_22 {dimension_numbers = #tpu.dot_dimension_numbers<[1], [0], [0], [1], [0, 0, 1, 1], [], []>} : vector<48x8xf32>, vector<8x128xf32>, vector<48x128xf32> -> vector<48x128xf32>
    %51 = vector.extract_strided_slice %50 {offsets = [16, 0], sizes = [16, 128], strides = [1, 1]} : vector<48x128xf32> to vector<16x128xf32>
    %52 = vector.broadcast %12 : vector<16x1xf32> to vector<16x128xf32>
    %53 = arith.addf %51, %52 : vector<16x128xf32>
    %54 = vector.extract_strided_slice %50 {offsets = [0, 0], sizes = [16, 128], strides = [1, 1]} : vector<48x128xf32> to vector<16x128xf32>
    %c1_i32 = arith.constant 1 : i32
    %55 = tpu.dynamic_rotate %54 by %c1_i32 dim 1 : vector<16x128xf32>, i32 -> vector<16x128xf32>
    %56 = vector.broadcast %4 : vector<1x128xf32> to vector<16x128xf32>
    %57 = arith.mulf %56, %55 : vector<16x128xf32>
    %58 = arith.addf %53, %57 : vector<16x128xf32>
    %59 = vector.extract_strided_slice %50 {offsets = [32, 0], sizes = [16, 128], strides = [1, 1]} : vector<48x128xf32> to vector<16x128xf32>
    %c127_i32_23 = arith.constant 127 : i32
    %60 = tpu.dynamic_rotate %59 by %c127_i32_23 dim 1 : vector<16x128xf32>, i32 -> vector<16x128xf32>
    %61 = vector.broadcast %8 : vector<1x128xf32> to vector<16x128xf32>
    %62 = arith.mulf %61, %60 : vector<16x128xf32>
    %63 = arith.addf %58, %62 : vector<16x128xf32>
    %cst_24 = arith.constant dense<0.000000e+00> : vector<16xf32>
    %64 = vector.multi_reduction <add>, %63, %cst_24 [1] : vector<16x128xf32> to vector<16xf32>
    %65 = vector.shape_cast %64 : vector<16xf32> to vector<16x1xf32>
    %cst_25 = arith.constant 1.280000e+02 : f32
    %66 = vector.broadcast %cst_25 : f32 to vector<16x1xf32>
    %67 = arith.divf %65, %66 : vector<16x1xf32>
    %68 = arith.mulf %63, %63 : vector<16x128xf32>
    %cst_26 = arith.constant dense<0.000000e+00> : vector<16xf32>
    %69 = vector.multi_reduction <add>, %68, %cst_26 [1] : vector<16x128xf32> to vector<16xf32>
    %70 = vector.shape_cast %69 : vector<16xf32> to vector<16x1xf32>
    %cst_27 = arith.constant 1.280000e+02 : f32
    %71 = vector.broadcast %cst_27 : f32 to vector<16x1xf32>
    %72 = arith.divf %70, %71 : vector<16x1xf32>
    %73 = arith.mulf %67, %67 : vector<16x1xf32>
    %74 = arith.subf %72, %73 : vector<16x1xf32>
    %cst_28 = arith.constant 0.000000e+00 : f32
    %75 = vector.broadcast %cst_28 : f32 to vector<16x1xf32>
    %76 = arith.maximumf %74, %75 : vector<16x1xf32>
    %cst_29 = arith.constant 9.99999974E-6 : f32
    %77 = vector.broadcast %cst_29 : f32 to vector<16x1xf32>
    %78 = arith.addf %76, %77 : vector<16x1xf32>
    %79 = math.rsqrt %78 : vector<16x1xf32>
    %80 = arith.mulf %20, %79 : vector<16x1xf32>
    %81 = arith.mulf %67, %80 : vector<16x1xf32>
    %82 = arith.subf %21, %81 : vector<16x1xf32>
    %83 = vector.broadcast %80 : vector<16x1xf32> to vector<16x128xf32>
    %84 = arith.mulf %63, %83 : vector<16x128xf32>
    %85 = vector.broadcast %82 : vector<16x1xf32> to vector<16x128xf32>
    %86 = arith.addf %84, %85 : vector<16x128xf32>
    %cst_30 = arith.constant 0.000000e+00 : f32
    %87 = vector.broadcast %cst_30 : f32 to vector<16x128xf32>
    %88 = arith.cmpf oge, %86, %87 : vector<16x128xf32>
    %cst_31 = arith.constant 2.000000e-01 : f32
    %89 = vector.broadcast %cst_31 : f32 to vector<16x128xf32>
    %90 = arith.mulf %89, %86 : vector<16x128xf32>
    %91 = arith.select %88, %86, %90 : vector<16x128xi1>, vector<16x128xf32>
    %cst_32 = arith.constant dense<0.000000e+00> : vector<48x128xf32>
    %92 = tpu.matmul %10, %91, %cst_32 {dimension_numbers = #tpu.dot_dimension_numbers<[1], [0], [0], [1], [0, 0, 1, 1], [], []>} : vector<48x16xf32>, vector<16x128xf32>, vector<48x128xf32> -> vector<48x128xf32>
    %93 = vector.extract_strided_slice %92 {offsets = [16, 0], sizes = [16, 128], strides = [1, 1]} : vector<48x128xf32> to vector<16x128xf32>
    %94 = vector.broadcast %13 : vector<16x1xf32> to vector<16x128xf32>
    %95 = arith.addf %93, %94 : vector<16x128xf32>
    %96 = vector.extract_strided_slice %92 {offsets = [0, 0], sizes = [16, 128], strides = [1, 1]} : vector<48x128xf32> to vector<16x128xf32>
    %c1_i32_33 = arith.constant 1 : i32
    %97 = tpu.dynamic_rotate %96 by %c1_i32_33 dim 1 : vector<16x128xf32>, i32 -> vector<16x128xf32>
    %98 = vector.broadcast %4 : vector<1x128xf32> to vector<16x128xf32>
    %99 = arith.mulf %98, %97 : vector<16x128xf32>
    %100 = arith.addf %95, %99 : vector<16x128xf32>
    %101 = vector.extract_strided_slice %92 {offsets = [32, 0], sizes = [16, 128], strides = [1, 1]} : vector<48x128xf32> to vector<16x128xf32>
    %c127_i32_34 = arith.constant 127 : i32
    %102 = tpu.dynamic_rotate %101 by %c127_i32_34 dim 1 : vector<16x128xf32>, i32 -> vector<16x128xf32>
    %103 = vector.broadcast %8 : vector<1x128xf32> to vector<16x128xf32>
    %104 = arith.mulf %103, %102 : vector<16x128xf32>
    %105 = arith.addf %100, %104 : vector<16x128xf32>
    %cst_35 = arith.constant dense<0.000000e+00> : vector<16x128xf32>
    %106 = tpu.matmul %11, %15, %cst_35 {dimension_numbers = #tpu.dot_dimension_numbers<[1], [0], [0], [1], [0, 0, 1, 1], [], []>} : vector<16x8xf32>, vector<8x128xf32>, vector<16x128xf32> -> vector<16x128xf32>
    %107 = arith.addf %105, %106 : vector<16x128xf32>
    %cst_36 = arith.constant 0.707106769 : f32
    %108 = vector.broadcast %cst_36 : f32 to vector<16x128xf32>
    %109 = arith.mulf %107, %108 : vector<16x128xf32>
    %c0_37 = arith.constant 0 : index
    %c0_38 = arith.constant 0 : index
    %c0_39 = arith.constant 0 : index
    %110 = vector.load %arg8[%c0_37, %c0_38, %c0_39] : memref<1x16x128xf32, #tpu.memory_space<vmem>>, vector<1x16x128xf32>
    %111 = vector.shape_cast %110 : vector<1x16x128xf32> to vector<16x128xf32>
    %112 = vector.shape_cast %109 : vector<16x128xf32> to vector<1x16x128xf32>
    tpu.vector_store %arg8[%c0_37, %c0_38, %c0_39], %112 {strides = array<i32>} : memref<1x16x128xf32, #tpu.memory_space<vmem>>, vector<1x16x128xf32>,
    return
  }
  func.func @transform_0(%arg0: i32) -> (i32, i32, i32) {
    %c0_i32 = arith.constant 0 : i32
    %c0_i32_0 = arith.constant 0 : i32
    %c0_i32_1 = arith.constant 0 : i32
    return %arg0, %c0_i32, %c0_i32_0 : i32, i32, i32
  }
  func.func @transform_1(%arg0: i32) -> (i32, i32, i32) {
    %c0_i32 = arith.constant 0 : i32
    %c0_i32_0 = arith.constant 0 : i32
    %c0_i32_1 = arith.constant 0 : i32
    return %arg0, %c0_i32, %c0_i32_0 : i32, i32, i32
  }
  func.func @transform_2(%arg0: i32) -> (i32, i32) {
    %c0_i32 = arith.constant 0 : i32
    %c0_i32_0 = arith.constant 0 : i32
    %c0_i32_1 = arith.constant 0 : i32
    return %c0_i32, %c0_i32_0 : i32, i32
  }
  func.func @transform_3(%arg0: i32) -> (i32, i32) {
    %c0_i32 = arith.constant 0 : i32
    %c0_i32_0 = arith.constant 0 : i32
    %c0_i32_1 = arith.constant 0 : i32
    return %c0_i32, %c0_i32_0 : i32, i32
  }
  func.func @transform_4(%arg0: i32) -> (i32, i32) {
    %c0_i32 = arith.constant 0 : i32
    %c0_i32_0 = arith.constant 0 : i32
    %c0_i32_1 = arith.constant 0 : i32
    return %c0_i32, %c0_i32_0 : i32, i32
  }
  func.func @transform_5(%arg0: i32) -> (i32, i32) {
    %c0_i32 = arith.constant 0 : i32
    %c0_i32_0 = arith.constant 0 : i32
    %c0_i32_1 = arith.constant 0 : i32
    return %c0_i32, %c0_i32_0 : i32, i32
  }
  func.func @transform_6(%arg0: i32) -> (i32, i32) {
    %c0_i32 = arith.constant 0 : i32
    %c0_i32_0 = arith.constant 0 : i32
    %c0_i32_1 = arith.constant 0 : i32
    return %c0_i32, %c0_i32_0 : i32, i32
  }
  func.func @transform_7(%arg0: i32) -> (i32, i32, i32) {
    %c0_i32 = arith.constant 0 : i32
    %c0_i32_0 = arith.constant 0 : i32
    %c0_i32_1 = arith.constant 0 : i32
    return %arg0, %c0_i32, %c0_i32_0 : i32, i32, i32
  }
}

</mosaic_0001>

<llo_original>
// kernel: tpu_custom_call.1
$region0: #{tpu_custom_call.1}
  #allocation0 [shape = 'u32[]', space=smem, size = 0x4, offset = 0x4, fixed_abs, tag = 'smem constant byte address 0x4 - core index']
  #allocation1 [shape = 'u32[72,128]{1,0:T(1,128)}', space=vmem, size = 0x9000, scoped, tag = 'internal scratch']
  %s0 = inlined_call_operand.vmem [shape: f32[2,8,128], index: 0, kind: input, shape index: {}]
  %s1 = inlined_call_operand.vmem [shape: f32[2,48,1], index: 1, kind: input, shape index: {}]
  %s2 = inlined_call_operand.vmem [shape: f32[48,8], index: 2, kind: input, shape index: {}]
  %s3 = inlined_call_operand.vmem [shape: f32[16,1], index: 3, kind: input, shape index: {}]
  %s4 = inlined_call_operand.vmem [shape: f32[48,16], index: 4, kind: input, shape index: {}]
  %s5 = inlined_call_operand.vmem [shape: f32[16,1], index: 5, kind: input, shape index: {}]
  %s6 = inlined_call_operand.vmem [shape: f32[16,8], index: 6, kind: input, shape index: {}]
  %s7 = inlined_call_operand.hbm [shape: f32[2,16,128], index: 7, kind: output, shape index: {}]
  %s8 = sld [smem:[#allocation0]]
  $region61: #{tpu_custom_call.1} parent=0
    _
  %s10 = ssub.s32 1, %s8
  %s11 = scalar_select 0, %s10, %s8
  $region1: #{tpu_custom_call.1} parent=0
    #allocation2 [shape = 'u8[16384]{0}', space=vmem, size = 0x4000, scoped, tag = 'output window, operand 0']
    #allocation3 [shape = 's32[2]{0}', space=sflag, size = 0x8, scoped, tag = 'scoped memory for tpu_custom_call.1']
    %12 = vsyncpa [#allocation3], 0
    %s13 = scalar_lea.sflag [#allocation3], 1
    %14 = vsyncpa %s13, 0
    loop: start=0, step=1, limit=4
    $region2: #{tpu_custom_call.1} parent=1 // loop_pre_header
      _
    $region3: #{tpu_custom_call.1} parent=1 // loop_header
      %s16 = sphi 0, %s20
      %p17 = scmp.ge.s32.totalorder %s16, 4
      %s26 = sphi 0, %s28
      %s29 = sphi 0, %s26
      %s30 = sphi 0, %s29
      %s46 = sphi 0, %s30
      %s52 = sphi 0, %s54
      %s55 = sphi 0, %s52
      %s56 = sphi 0, %s55
      %s72 = sphi 0, %s56
      %s76 = sphi 0, %s76
      %s78 = sphi 0, %s76
      %s79 = sphi 0, %s78
      %s93 = sphi 0, %s79
      %s97 = sphi 0, %s97
      %s99 = sphi 0, %s97
      %s100 = sphi 0, %s99
      %s114 = sphi 0, %s100
      %s118 = sphi 0, %s118
      %s120 = sphi 0, %s118
      %s121 = sphi 0, %s120
      %s135 = sphi 0, %s121
      %s139 = sphi 0, %s139
      %s141 = sphi 0, %s139
      %s142 = sphi 0, %s141
      %s156 = sphi 0, %s142
      %s160 = sphi 0, %s160
      %s162 = sphi 0, %s160
      %s163 = sphi 0, %s162
      %s177 = sphi 0, %s163
      %s183 = sphi 0, %s185
      %s186 = sphi 0, %s183
      %s187 = sphi 0, %s186
      %s203 = sphi 0, %s187
    $region4: #{tpu_custom_call.1} parent=1 // loop_header_branch
      %19 = sbr.rel (%p17) target = $region8
    $region5: #{tpu_custom_call.1} parent=1 // loop_body
      %s21 = ssub.s32 %s16, 1
      %s22 = ssub.s32 %s16, 2
      %s23 = sadd.s32 %s16, 1
      %s24 = ssub.s32 %s16, %s23
      %p25 = scmp.eq.s32.totalorder %s24, 0
      %s27 = sadd.s32 %s26, 1
      %s28 = scalar_select %p25, %s26, %s27
      %p31 = pneg %p25
      %p32 = scmp.eq.s32.totalorder %s16, 1
      %p33 = por %p31, %p32
      %p34 = scmp.ne.s32.totalorder %s26, %s29
      %p35 = scmp.eq.s32.totalorder %s16, 0
      %p36 = por %p34, %p35
      %p37 = scmp.ne.s32.totalorder %s26, %s29
      %p38 = scmp.eq.s32.totalorder %s21, 1
      %p39 = por %p37, %p38
      %p40 = scmp.ne.s32.totalorder %s29, %s30
      %p41 = scmp.eq.s32.totalorder %s21, 0
      %p42 = por %p40, %p41
      %p43 = scmp.ne.s32.totalorder %s29, %s30
      %p44 = scmp.eq.s32.totalorder %s22, 1
      %p45 = por %p43, %p44
      %p47 = scmp.ne.s32.totalorder %s30, %s46
      %p48 = scmp.eq.s32.totalorder %s22, 0
      %p49 = por %p47, %p48
      %s50 = ssub.s32 %s16, %s23
      %p51 = scmp.eq.s32.totalorder %s50, 0
      %s53 = sadd.s32 %s52, 1
      %s54 = scalar_select %p51, %s52, %s53
      %p57 = pneg %p51
      %p58 = scmp.eq.s32.totalorder %s16, 1
      %p59 = por %p57, %p58
      %p60 = scmp.ne.s32.totalorder %s52, %s55
      %p61 = scmp.eq.s32.totalorder %s16, 0
      %p62 = por %p60, %p61
      %p63 = scmp.ne.s32.totalorder %s52, %s55
      %p64 = scmp.eq.s32.totalorder %s21, 1
      %p65 = por %p63, %p64
      %p66 = scmp.ne.s32.totalorder %s55, %s56
      %p67 = scmp.eq.s32.totalorder %s21, 0
      %p68 = por %p66, %p67
      %p69 = scmp.ne.s32.totalorder %s55, %s56
      %p70 = scmp.eq.s32.totalorder %s22, 1
      %p71 = por %p69, %p70
      %p73 = scmp.ne.s32.totalorder %s56, %s72
      %p74 = scmp.eq.s32.totalorder %s22, 0
      %p75 = por %p73, %p74
      %s77 = sadd.s32 %s76, 1
      %p80 = scmp.eq.s32.totalorder %s16, 1
      %p81 = scmp.ne.s32.totalorder %s76, %s78
      %p82 = scmp.eq.s32.totalorder %s16, 0
      %p83 = por %p81, %p82
      %p84 = scmp.ne.s32.totalorder %s76, %s78
      %p85 = scmp.eq.s32.totalorder %s21, 1
      %p86 = por %p84, %p85
      %p87 = scmp.ne.s32.totalorder %s78, %s79
      %p88 = scmp.eq.s32.totalorder %s21, 0
      %p89 = por %p87, %p88
      %p90 = scmp.ne.s32.totalorder %s78, %s79
      %p91 = scmp.eq.s32.totalorder %s22, 1
      %p92 = por %p90, %p91
      %p94 = scmp.ne.s32.totalorder %s79, %s93
      %p95 = scmp.eq.s32.totalorder %s22, 0
      %p96 = por %p94, %p95
      %s98 = sadd.s32 %s97, 1
      %p101 = scmp.eq.s32.totalorder %s16, 1
      %p102 = scmp.ne.s32.totalorder %s97, %s99
      %p103 = scmp.eq.s32.totalorder %s16, 0
      %p104 = por %p102, %p103
      %p105 = scmp.ne.s32.totalorder %s97, %s99
      %p106 = scmp.eq.s32.totalorder %s21, 1
      %p107 = por %p105, %p106
      %p108 = scmp.ne.s32.totalorder %s99, %s100
      %p109 = scmp.eq.s32.totalorder %s21, 0
      %p110 = por %p108, %p109
      %p111 = scmp.ne.s32.totalorder %s99, %s100
      %p112 = scmp.eq.s32.totalorder %s22, 1
      %p113 = por %p111, %p112
      %p115 = scmp.ne.s32.totalorder %s100, %s114
      %p116 = scmp.eq.s32.totalorder %s22, 0
      %p117 = por %p115, %p116
      %s119 = sadd.s32 %s118, 1
      %p122 = scmp.eq.s32.totalorder %s16, 1
      %p123 = scmp.ne.s32.totalorder %s118, %s120
      %p124 = scmp.eq.s32.totalorder %s16, 0
      %p125 = por %p123, %p124
      %p126 = scmp.ne.s32.totalorder %s118, %s120
      %p127 = scmp.eq.s32.totalorder %s21, 1
      %p128 = por %p126, %p127
      %p129 = scmp.ne.s32.totalorder %s120, %s121
      %p130 = scmp.eq.s32.totalorder %s21, 0
      %p131 = por %p129, %p130
      %p132 = scmp.ne.s32.totalorder %s120, %s121
      %p133 = scmp.eq.s32.totalorder %s22, 1
      %p134 = por %p132, %p133
      %p136 = scmp.ne.s32.totalorder %s121, %s135
      %p137 = scmp.eq.s32.totalorder %s22, 0
      %p138 = por %p136, %p137
      %s140 = sadd.s32 %s139, 1
      %p143 = scmp.eq.s32.totalorder %s16, 1
      %p144 = scmp.ne.s32.totalorder %s139, %s141
      %p145 = scmp.eq.s32.totalorder %s16, 0
      %p146 = por %p144, %p145
      %p147 = scmp.ne.s32.totalorder %s139, %s141
      %p148 = scmp.eq.s32.totalorder %s21, 1
      %p149 = por %p147, %p148
      %p150 = scmp.ne.s32.totalorder %s141, %s142
      %p151 = scmp.eq.s32.totalorder %s21, 0
      %p152 = por %p150, %p151
      %p153 = scmp.ne.s32.totalorder %s141, %s142
      %p154 = scmp.eq.s32.totalorder %s22, 1
      %p155 = por %p153, %p154
      %p157 = scmp.ne.s32.totalorder %s142, %s156
      %p158 = scmp.eq.s32.totalorder %s22, 0
      %p159 = por %p157, %p158
      %s161 = sadd.s32 %s160, 1
      %p164 = scmp.eq.s32.totalorder %s16, 1
      %p165 = scmp.ne.s32.totalorder %s160, %s162
      %p166 = scmp.eq.s32.totalorder %s16, 0
      %p167 = por %p165, %p166
      %p168 = scmp.ne.s32.totalorder %s160, %s162
      %p169 = scmp.eq.s32.totalorder %s21, 1
      %p170 = por %p168, %p169
      %p171 = scmp.ne.s32.totalorder %s162, %s163
      %p172 = scmp.eq.s32.totalorder %s21, 0
      %p173 = por %p171, %p172
      %p174 = scmp.ne.s32.totalorder %s162, %s163
      %p175 = scmp.eq.s32.totalorder %s22, 1
      %p176 = por %p174, %p175
      %p178 = scmp.ne.s32.totalorder %s163, %s177
      %p179 = scmp.eq.s32.totalorder %s22, 0
      %p180 = por %p178, %p179
      %s181 = ssub.s32 %s16, %s23
      %p182 = scmp.eq.s32.totalorder %s181, 0
      %s184 = sadd.s32 %s183, 1
      %s185 = scalar_select %p182, %s183, %s184
      %p188 = pneg %p182
      %p189 = scmp.eq.s32.totalorder %s16, 1
      %p190 = por %p188, %p189
      %p191 = scmp.ne.s32.totalorder %s183, %s186
      %p192 = scmp.eq.s32.totalorder %s16, 0
      %p193 = por %p191, %p192
      %p194 = scmp.ne.s32.totalorder %s183, %s186
      %p195 = scmp.eq.s32.totalorder %s21, 1
      %p196 = por %p194, %p195
      %p197 = scmp.ne.s32.totalorder %s186, %s187
      %p198 = scmp.eq.s32.totalorder %s21, 0
      %p199 = por %p197, %p198
      %p200 = scmp.ne.s32.totalorder %s186, %s187
      %p201 = scmp.eq.s32.totalorder %s22, 1
      %p202 = por %p200, %p201
      %p204 = scmp.ne.s32.totalorder %s187, %s203
      %p205 = scmp.eq.s32.totalorder %s22, 0
      %p206 = por %p204, %p205
      %p207 = scmp.le.s32.totalorder 1, %s16
      %p208 = scmp.lt.s32.totalorder %s16, 3
      %p209 = pnand %p207, %p208
      %p210 = pneg %p209
      // Predicated region
      $region9: #{tpu_custom_call.1} parent=5 // pred_check
        _
      $region10: #{tpu_custom_call.1} parent=5 // pred_check_branch
        %212 = sbr.rel (%p209) target = $region12
      $region11: #{tpu_custom_call.1} parent=5 // pred_region
        %s213 = ssub.s32 %s16, 1
        // Predicated region
        $region13: #{tpu_custom_call.1} parent=11 // pred_check
          %p214 = pneg %p89
        $region14: #{tpu_custom_call.1} parent=11 // pred_check_branch
          %216 = sbr.rel (%p214) target = $region16
        $region15: #{tpu_custom_call.1} parent=11 // pred_region
          _
        $region16: #{tpu_custom_call.1} parent=11 // pred_fallthru
          _
        // Predicated region
        $region17: #{tpu_custom_call.1} parent=11 // pred_check
          %p217 = pneg %p110
        $region18: #{tpu_custom_call.1} parent=11 // pred_check_branch
          %219 = sbr.rel (%p217) target = $region20
        $region19: #{tpu_custom_call.1} parent=11 // pred_region
          _
        $region20: #{tpu_custom_call.1} parent=11 // pred_fallthru
          _
        // Predicated region
        $region21: #{tpu_custom_call.1} parent=11 // pred_check
          %p220 = pneg %p131
        $region22: #{tpu_custom_call.1} parent=11 // pred_check_branch
          %222 = sbr.rel (%p220) target = $region24
        $region23: #{tpu_custom_call.1} parent=11 // pred_region
          _
        $region24: #{tpu_custom_call.1} parent=11 // pred_fallthru
          _
        // Predicated region
        $region25: #{tpu_custom_call.1} parent=11 // pred_check
          %p223 = pneg %p152
        $region26: #{tpu_custom_call.1} parent=11 // pred_check_branch
          %225 = sbr.rel (%p223) target = $region28
        $region27: #{tpu_custom_call.1} parent=11 // pred_region
          _
        $region28: #{tpu_custom_call.1} parent=11 // pred_fallthru
          _
        // Predicated region
        $region29: #{tpu_custom_call.1} parent=11 // pred_check
          %p226 = pneg %p173
        $region30: #{tpu_custom_call.1} parent=11 // pred_check_branch
          %228 = sbr.rel (%p226) target = $region32
        $region31: #{tpu_custom_call.1} parent=11 // pred_region
          _
        $region32: #{tpu_custom_call.1} parent=11 // pred_fallthru
          _
      $region12: #{tpu_custom_call.1} parent=5 // pred_fallthru
        _
      %p229 = scmp.lt.s32.totalorder %s16, 2
      // Predicated region
      $region33: #{tpu_custom_call.1} parent=5 // pred_check
        %p230 = pneg %p229
      $region34: #{tpu_custom_call.1} parent=5 // pred_check_branch
        %232 = sbr.rel (%p230) target = $region36
      $region35: #{tpu_custom_call.1} parent=5 // pred_region
        // Predicated region
        $region37: #{tpu_custom_call.1} parent=35 // pred_check
          %p233 = pneg %p36
        $region38: #{tpu_custom_call.1} parent=35 // pred_check_branch
          %235 = sbr.rel (%p233) target = $region40
        $region39: #{tpu_custom_call.1} parent=35 // pred_region
          %p236 = scmp.lt.s32.totalorder %s16, 1
          %s237 = scalar_select %p236, %s16, 1
          %s238 = smul.addr %s237, 8
          %s239 = scalar_lea.vmem %s0, %s238
        $region40: #{tpu_custom_call.1} parent=35 // pred_fallthru
          _
        // Predicated region
        $region41: #{tpu_custom_call.1} parent=35 // pred_check
          %p240 = pneg %p62
        $region42: #{tpu_custom_call.1} parent=35 // pred_check_branch
          %242 = sbr.rel (%p240) target = $region44
        $region43: #{tpu_custom_call.1} parent=35 // pred_region
          %p243 = scmp.lt.s32.totalorder %s16, 1
          %s244 = scalar_select %p243, %s16, 1
          %s245 = smul.addr %s244, 6
          %s246 = smul.addr %s245, 8
          %s247 = scalar_lea.vmem %s1, %s246
        $region44: #{tpu_custom_call.1} parent=35 // pred_fallthru
          _
      $region36: #{tpu_custom_call.1} parent=5 // pred_fallthru
        _
      %p248 = scmp.le.s32.totalorder 1, %s16
      %p249 = scmp.lt.s32.totalorder %s16, 3
      %p250 = pnand %p248, %p249
      %p251 = pneg %p250
      // Predicated region
      $region45: #{tpu_custom_call.1} parent=5 // pred_check
        _
      $region46: #{tpu_custom_call.1} parent=5 // pred_check_branch
        %253 = sbr.rel (%p250) target = $region48
      $region47: #{tpu_custom_call.1} parent=5 // pred_region
        %s254 = ssub.s32 %s16, 1
        %p255 = scmp.lt.s32.totalorder %s21, 1
        %s256 = scalar_select %p255, %s21, 1
        %s257 = smul.addr %s256, 8
        %s258 = scalar_lea.vmem %s0, %s257
        %p259 = pneg %p42
        %p260 = pneg %p39
        %p261 = scmp.lt.s32.totalorder %s21, 1
        %s262 = scalar_select %p261, %s21, 1
        %s263 = smul.addr %s262, 6
        %s264 = smul.addr %s263, 8
        %s265 = scalar_lea.vmem %s1, %s264
        %p266 = pneg %p68
        %p267 = pneg %p65
        %p268 = pneg %p89
        %p269 = pneg %p86
        %p270 = pneg %p110
        %p271 = pneg %p107
        %p272 = pneg %p131
        %p273 = pneg %p128
        %p274 = pneg %p152
        %p275 = pneg %p149
        %p276 = pneg %p173
        %p277 = pneg %p170
        %p278 = pneg %p199
        %p279 = pneg %p196
        %s280 = sand.u32 %s186, 1
        %s281 = scalar_lea.sflag [#allocation3], %s280
        %s282 = sand.u32 %s186, 1
        %s283 = smul.addr %s282, 16
        %s284 = scalar_lea.vmem [#allocation2], %s283
        %p285 = scmp.lt.s32.totalorder %s21, 1
        %s286 = scalar_select %p285, %s21, 1
        %s287 = smul.addr %s286, 8
        %s288 = scalar_lea.vmem %s0, %s287
        %p289 = scmp.lt.s32.totalorder %s21, 1
        %s290 = scalar_select %p289, %s21, 1
        %s291 = smul.addr %s290, 6
        %s292 = smul.addr %s291, 8
        %s293 = scalar_lea.vmem %s1, %s292
        %v294 = vlaneseq
        %v295 = vand.u32 %v294, 127
        %vm296 = vcmp.ne.s32.totalorder %v295, 0
        %v297 = vsel %vm296, 1, 0
        %v298 = vcvt.s32.f32 %v297
        %vm299 = vcmp.ne.s32.totalorder %v295, 127
        %v300 = vsel %vm299, 1, 0
        %v301 = vcvt.s32.f32 %v300
        %v302 = vld [vmem:[%s2] sm:$0xff]
        %v303 = vld [vmem:[%s2 + $0x8] sm:$0xff]
        %v304 = vld [vmem:[%s2 + $0x10] sm:$0xff]
        %v305 = vld [vmem:[%s2 + $0x18] sm:$0xff]
        %v306 = vld [vmem:[%s2 + $0x20] sm:$0xff]
        %v307 = vld [vmem:[%s2 + $0x28] sm:$0xff]
        %v308 = vld [vmem:[%s4] sm:$0xff]
        %v309 = vld [vmem:[%s4 + $0x8] sm:$0xff]
        %v310 = vld [vmem:[%s4 + $0x10] sm:$0xff]
        %v311 = vld [vmem:[%s4 + $0x18] sm:$0xff]
        %v312 = vld [vmem:[%s4 + $0x20] sm:$0xff]
        %v313 = vld [vmem:[%s4 + $0x28] sm:$0xff]
        %v314 = vld [vmem:[%s6] sm:$0xff]
        %v315 = vld [vmem:[%s6 + $0x8] sm:$0xff]
        %v316 = vld [vmem:[%s3] sm:$0xff]
        %v317 = vld [vmem:[%s3 + $0x8] sm:$0xff]
        %v318 = vld [vmem:[%s5] sm:$0xff]
        %v319 = vld [vmem:[%s5 + $0x8] sm:$0xff]
        %v320 = vld [vmem:[%s288] sm:$0xff]
        %v321 = vld [vmem:[%s293] sm:$0xff]
        %v322 = vld [vmem:[%s293 + $0x8] sm:$0xff]
        %v323 = vld [vmem:[%s293 + $0x10] sm:$0xff]
        %v324 = vld [vmem:[%s293 + $0x18] sm:$0xff]
        %v325 = vld [vmem:[%s293 + $0x20] sm:$0xff]
        %v326 = vld [vmem:[%s293 + $0x28] sm:$0xff]
        %327 = vadd.xlane.f32.xlu0 %v320
        %v328 = vpop.xlane.xlu0 %327
        %v329 = vrcp.pop 128.0
        %v330 = vmul.f32 128.0, %v329
        %v331 = vsub.f32 1.0, %v330
        %v332 = vmul.f32 %v329, %v331
        %v333 = vadd.f32 %v329, %v332
        %vm334 = vweird.f32 %v329
        %v335 = vsel %vm334, %v329, %v333
        %v336 = vmul.f32 %v328, %v335
        %v337 = vmul.f32 %v320, %v320
        %338 = vadd.xlane.f32.xlu0 %v337
        %v339 = vpop.xlane.xlu0 %338
        %v340 = vmul.f32 %v339, %v335
        %v341 = vmul.f32 %v336, %v336
        %v342 = vsub.f32 %v340, %v341
        %v343 = vmax.f32 %v342, 0.0
        %v344 = vadd.f32 %v343, 1e-05
        %v345 = vrsqrt.pop %v344
        %v346 = vmul.f32 %v345, %v344
        %v347 = vmul.f32 %v346, %v345
        %v348 = vmul.f32 0.5, %v347
        %v349 = vsub.f32 1.5, %v348
        %v350 = vmul.f32 %v345, %v349
        %vm351 = vweird.f32 %v344
        %vm352 = vweird.f32 %v345
        %vm353 = vmor %vm351, %vm352
        %v354 = vsel %vm353, %v345, %v350
        %v355 = vmul.f32 %v321, %v354
        %v356 = vmul.f32 %v336, %v355
        %v357 = vsub.f32 %v322, %v356
        %359 = vset.pattern.permute.xlu0 0
        %360 = vperm.xlu0 %359, %v355
        %v361 = vpop.permute.xlu0 %360
        %v363 = vmul.f32 %v320, %v361
        %365 = vset.pattern.permute.xlu0 0
        %366 = vperm.xlu0 %365, %v357
        %v367 = vpop.permute.xlu0 %366
        %v369 = vadd.f32 %v363, %v367
        %vm370 = vcmp.ge.f32.partialorder %v369, 0.0
        %v371 = vmul.f32 %v369, 0.2
        %v372 = vsel %vm370, %v369, %v371
        %vm373 = vcmask 64512
        %v375 = vsel %vm373, %v302, 0
        %v378 = vsel %vm373, %v303, 0
        %v381 = vsel %vm373, %v304, 0
        %v384 = vsel %vm373, %v305, 0
        %v387 = vsel %vm373, %v306, 0
        %v390 = vsel %vm373, %v307, 0
        %392 = vmatpush.msra.mxu0 0.0
        %393 = vmatpush.msra.mxu0 0.0
        %394 = vmatpush.msra.mxu0 0.0
        %395 = vmatpush.msra.mxu0 0.0
        %396 = vmatpush.msra.mxu0 0.0
        %397 = vmatpush.msra.mxu0 0.0
        %398 = vmatpush.msra.mxu0 0.0
        %399 = vmatpush.msra.mxu0 0.0
        %400 = vmatpush.msra.mxu0 0.0
        %401 = vmatpush.msra.mxu0 0.0
        %402 = vmatpush.msra.mxu0 0.0
        %403 = vmatpush.msra.mxu0 0.0
        %404 = vmatpush.msra.mxu0 0.0
        %405 = vmatpush.msra.mxu0 0.0
        %406 = vmatpush.msra.mxu0 0.0
        %407 = vmatpush.msra.mxu0 %v372
        %408 = vmatmul.f32.gmra.mxu0 %v375
        %v409 = vpop.f32.mrf.mxu0
        %v410 = vadd.f32 0.0, %v409
        %411 = vmatmul.f32.gmra.mxu0 %v378
        %v412 = vpop.f32.mrf.mxu0
        %v413 = vadd.f32 0.0, %v412
        %414 = vmatmul.f32.gmra.mxu0 %v381
        %v415 = vpop.f32.mrf.mxu0
        %v416 = vadd.f32 0.0, %v415
        %417 = vmatmul.f32.gmra.mxu0 %v384
        %v418 = vpop.f32.mrf.mxu0
        %v419 = vadd.f32 0.0, %v418
        %420 = vmatmul.f32.gmra.mxu0 %v387
        %v421 = vpop.f32.mrf.mxu0
        %v422 = vadd.f32 0.0, %v421
        %423 = vmatmul.f32.gmra.mxu0 %v390
        %v424 = vpop.f32.mrf.mxu0
        %v425 = vadd.f32 0.0, %v424
        %426 = vdwg.mxu0
        %428 = vset.pattern.permute.xlu0 0
        %429 = vperm.xlu0 %428, %v316
        %v430 = vpop.permute.xlu0 %429
        %433 = vset.pattern.permute.xlu0 0
        %434 = vperm.xlu0 %433, %v317
        %v435 = vpop.permute.xlu0 %434
        %v437 = vadd.f32 %v416, %v430
        %v438 = vadd.f32 %v419, %v435
        %439 = vrot.lane.b32.xlu0 %v410, 1
        %v440 = vpop.permute.xlu0 %439
        %441 = vrot.lane.b32.xlu0 %v413, 1
        %v442 = vpop.permute.xlu0 %441
        %v443 = vmul.f32 %v298, %v440
        %v444 = vmul.f32 %v298, %v442
        %v445 = vadd.f32 %v437, %v443
        %v446 = vadd.f32 %v438, %v444
        %447 = vrot.lane.b32.xlu0 %v422, 127
        %v448 = vpop.permute.xlu0 %447
        %449 = vrot.lane.b32.xlu0 %v425, 127
        %v450 = vpop.permute.xlu0 %449
        %v451 = vmul.f32 %v301, %v448
        %v452 = vmul.f32 %v301, %v450
        %v453 = vadd.f32 %v445, %v451
        %v454 = vadd.f32 %v446, %v452
        %455 = vadd.xlane.f32.xlu0 %v453
        %v456 = vpop.xlane.xlu0 %455
        %457 = vadd.xlane.f32.xlu0 %v454
        %v458 = vpop.xlane.xlu0 %457
        %v459 = vmul.f32 %v456, %v335
        %v460 = vmul.f32 %v458, %v335
        %v461 = vmul.f32 %v453, %v453
        %v462 = vmul.f32 %v454, %v454
        %463 = vadd.xlane.f32.xlu0 %v461
        %v464 = vpop.xlane.xlu0 %463
        %465 = vadd.xlane.f32.xlu0 %v462
        %v466 = vpop.xlane.xlu0 %465
        %v467 = vmul.f32 %v464, %v335
        %v468 = vmul.f32 %v466, %v335
        %v469 = vmul.f32 %v459, %v459
        %v470 = vmul.f32 %v460, %v460
        %v471 = vsub.f32 %v467, %v469
        %v472 = vsub.f32 %v468, %v470
        %v473 = vmax.f32 %v471, 0.0
        %v474 = vmax.f32 %v472, 0.0
        %v475 = vadd.f32 %v473, 1e-05
        %v476 = vadd.f32 %v474, 1e-05
        %v477 = vrsqrt.pop %v475
        %v478 = vmul.f32 %v477, %v475
        %v479 = vmul.f32 %v478, %v477
        %v480 = vmul.f32 0.5, %v479
        %v481 = vsub.f32 1.5, %v480
        %v482 = vmul.f32 %v477, %v481
        %vm483 = vweird.f32 %v475
        %vm484 = vweird.f32 %v477
        %vm485 = vmor %vm483, %vm484
        %v486 = vsel %vm485, %v477, %v482
        %v487 = vrsqrt.pop %v476
        %v488 = vmul.f32 %v487, %v476
        %v489 = vmul.f32 %v488, %v487
        %v490 = vmul.f32 0.5, %v489
        %v491 = vsub.f32 1.5, %v490
        %v492 = vmul.f32 %v487, %v491
        %vm493 = vweird.f32 %v476
        %vm494 = vweird.f32 %v487
        %vm495 = vmor %vm493, %vm494
        %v496 = vsel %vm495, %v487, %v492
        %v497 = vmul.f32 %v323, %v486
        %v498 = vmul.f32 %v324, %v496
        %v499 = vmul.f32 %v459, %v497
        %v500 = vmul.f32 %v460, %v498
        %v501 = vsub.f32 %v325, %v499
        %v502 = vsub.f32 %v326, %v500
        %504 = vset.pattern.permute.xlu0 0
        %505 = vperm.xlu0 %504, %v497
        %v506 = vpop.permute.xlu0 %505
        %509 = vset.pattern.permute.xlu0 0
        %510 = vperm.xlu0 %509, %v498
        %v511 = vpop.permute.xlu0 %510
        %v513 = vmul.f32 %v453, %v506
        %v514 = vmul.f32 %v454, %v511
        %516 = vset.pattern.permute.xlu0 0
        %517 = vperm.xlu0 %516, %v501
        %v518 = vpop.permute.xlu0 %517
        %521 = vset.pattern.permute.xlu0 0
        %522 = vperm.xlu0 %521, %v502
        %v523 = vpop.permute.xlu0 %522
        %v525 = vadd.f32 %v513, %v518
        %v526 = vadd.f32 %v514, %v523
        %vm527 = vcmp.ge.f32.partialorder %v525, 0.0
        %vm528 = vcmp.ge.f32.partialorder %v526, 0.0
        %v529 = vmul.f32 %v525, 0.2
        %v530 = vmul.f32 %v526, 0.2
        %v531 = vsel %vm527, %v525, %v529
        %v532 = vsel %vm528, %v526, %v530
        %vm533 = vcmask 130048
        %v535 = vsel %vm533, %v308, 0
        %v538 = vsel %vm533, %v309, 0
        %v541 = vsel %vm533, %v310, 0
        %v544 = vsel %vm533, %v311, 0
        %v547 = vsel %vm533, %v312, 0
        %v550 = vsel %vm533, %v313, 0
        %552 = vmatpush.msra.mxu0 0.0
        %553 = vmatpush.msra.mxu0 0.0
        %554 = vmatpush.msra.mxu0 0.0
        %555 = vmatpush.msra.mxu0 0.0
        %556 = vmatpush.msra.mxu0 0.0
        %557 = vmatpush.msra.mxu0 0.0
        %558 = vmatpush.msra.mxu0 0.0
        %559 = vmatpush.msra.mxu0 0.0
        %560 = vmatpush.msra.mxu0 0.0
        %561 = vmatpush.msra.mxu0 0.0
        %562 = vmatpush.msra.mxu0 0.0
        %563 = vmatpush.msra.mxu0 0.0
        %564 = vmatpush.msra.mxu0 0.0
        %565 = vmatpush.msra.mxu0 0.0
        %566 = vmatpush.msra.mxu0 %v532
        %567 = vmatpush.msra.mxu0 %v531
        %568 = vmatmul.f32.gmra.mxu0 %v535
        %v569 = vpop.f32.mrf.mxu0
        %v570 = vadd.f32 0.0, %v569
        %571 = vmatmul.f32.gmra.mxu0 %v538
        %v572 = vpop.f32.mrf.mxu0
        %v573 = vadd.f32 0.0, %v572
        %574 = vmatmul.f32.gmra.mxu0 %v541
        %v575 = vpop.f32.mrf.mxu0
        %v576 = vadd.f32 0.0, %v575
        %577 = vmatmul.f32.gmra.mxu0 %v544
        %v578 = vpop.f32.mrf.mxu0
        %v579 = vadd.f32 0.0, %v578
        %580 = vmatmul.f32.gmra.mxu0 %v547
        %v581 = vpop.f32.mrf.mxu0
        %v582 = vadd.f32 0.0, %v581
        %583 = vmatmul.f32.gmra.mxu0 %v550
        %v584 = vpop.f32.mrf.mxu0
        %v585 = vadd.f32 0.0, %v584
        %586 = vdwg.mxu0
        %588 = vset.pattern.permute.xlu0 0
        %589 = vperm.xlu0 %588, %v318
        %v590 = vpop.permute.xlu0 %589
        %593 = vset.pattern.permute.xlu0 0
        %594 = vperm.xlu0 %593, %v319
        %v595 = vpop.permute.xlu0 %594
        %v597 = vadd.f32 %v576, %v590
        %v598 = vadd.f32 %v579, %v595
        %599 = vrot.lane.b32.xlu0 %v570, 1
        %v600 = vpop.permute.xlu0 %599
        %601 = vrot.lane.b32.xlu0 %v573, 1
        %v602 = vpop.permute.xlu0 %601
        %v603 = vmul.f32 %v298, %v600
        %v604 = vmul.f32 %v298, %v602
        %v605 = vadd.f32 %v597, %v603
        %v606 = vadd.f32 %v598, %v604
        %607 = vrot.lane.b32.xlu0 %v582, 127
        %v608 = vpop.permute.xlu0 %607
        %609 = vrot.lane.b32.xlu0 %v585, 127
        %v610 = vpop.permute.xlu0 %609
        %v611 = vmul.f32 %v301, %v608
        %v612 = vmul.f32 %v301, %v610
        %v613 = vadd.f32 %v605, %v611
        %v614 = vadd.f32 %v606, %v612
        %v616 = vsel %vm373, %v314, 0
        %v619 = vsel %vm373, %v315, 0
        %621 = vmatpush.msra.mxu0 0.0
        %622 = vmatpush.msra.mxu0 0.0
        %623 = vmatpush.msra.mxu0 0.0
        %624 = vmatpush.msra.mxu0 0.0
        %625 = vmatpush.msra.mxu0 0.0
        %626 = vmatpush.msra.mxu0 0.0
        %627 = vmatpush.msra.mxu0 0.0
        %628 = vmatpush.msra.mxu0 0.0
        %629 = vmatpush.msra.mxu0 0.0
        %630 = vmatpush.msra.mxu0 0.0
        %631 = vmatpush.msra.mxu0 0.0
        %632 = vmatpush.msra.mxu0 0.0
        %633 = vmatpush.msra.mxu0 0.0
        %634 = vmatpush.msra.mxu0 0.0
        %635 = vmatpush.msra.mxu0 0.0
        %636 = vmatpush.msra.mxu0 %v320
        %637 = vmatmul.f32.gmra.mxu0 %v616
        %v638 = vpop.f32.mrf.mxu0
        %v639 = vadd.f32 0.0, %v638
        %640 = vmatmul.f32.gmra.mxu0 %v619
        %v641 = vpop.f32.mrf.mxu0
        %v642 = vadd.f32 0.0, %v641
        %643 = vdwg.mxu0
        %v644 = vadd.f32 %v613, %v639
        %v645 = vadd.f32 %v614, %v642
        %v646 = vmul.f32 %v644, 0.70710677
        %v647 = vmul.f32 %v645, 0.70710677
        %648 = vst [vmem:[%s284] sm:$0xff] %v646
        %649 = vst [vmem:[%s284 + $0x8] sm:$0xff] %v647
        %s650 = sand.u32 %s186, 1
        %s651 = scalar_lea.sflag [#allocation3], %s650
        %s652 = sand.u32 %s186, 1
        %s653 = smul.addr %s652, 16
        %s654 = scalar_lea.vmem [#allocation2], %s653
        // Predicated region
        $region49: #{tpu_custom_call.1} parent=47 // pred_check
          %p655 = pneg %p196
        $region50: #{tpu_custom_call.1} parent=47 // pred_check_branch
          %657 = sbr.rel (%p655) target = $region52
        $region51: #{tpu_custom_call.1} parent=47 // pred_region
          %659 = vsyncadd %s651, 0
          %s660 = smul.addr %s21, 2
          %s661 = smul.addr %s660, 8
          %s662 = scalar_lea.hbm %s7, %s661
          %s663 = sshll.u32 %s654, 4
          %s664 = int_to_ptr.vmem [resolvable:$true] %s663
          %s665 = sshll.u32 %s662, 4
          %s666 = int_to_ptr.hbm [resolvable:$true] %s665
          %671 = dma.vmem_to_hbm [thread:$0]  %s664, 256, %s666, %s651, 128, 128, 8
        $region52: #{tpu_custom_call.1} parent=47 // pred_fallthru
          _
      $region48: #{tpu_custom_call.1} parent=5 // pred_fallthru
        _
      %p672 = scmp.le.s32.totalorder 2, %s16
      // Predicated region
      $region53: #{tpu_custom_call.1} parent=5 // pred_check
        %p673 = pneg %p672
      $region54: #{tpu_custom_call.1} parent=5 // pred_check_branch
        %675 = sbr.rel (%p673) target = $region56
      $region55: #{tpu_custom_call.1} parent=5 // pred_region
        %s676 = ssub.s32 %s16, 2
        // Predicated region
        $region57: #{tpu_custom_call.1} parent=55 // pred_check
          %p677 = pneg %p202
        $region58: #{tpu_custom_call.1} parent=55 // pred_check_branch
          %679 = sbr.rel (%p677) target = $region60
        $region59: #{tpu_custom_call.1} parent=55 // pred_region
          %s680 = sand.u32 %s187, 1
          %s681 = scalar_lea.sflag [#allocation3], %s680
          %s682 = sand.u32 %s187, 1
          %s683 = smul.addr %s682, 16
          %s684 = scalar_lea.vmem [#allocation2], %s683
          %686 = dma.done %s681, 256
        $region60: #{tpu_custom_call.1} parent=55 // pred_fallthru
          _
      $region56: #{tpu_custom_call.1} parent=5 // pred_fallthru
        _
    $region6: #{tpu_custom_call.1} parent=1 // loop_footer
      %s20 = sadd.s32 1, %s16
    $region7: #{tpu_custom_call.1} parent=1 // loop_footer_branch
      %15 = sbr.rel target = $region3
    $region8: #{tpu_custom_call.1} parent=1 // loop_exit
      _
    %687 = vsyncpa [#allocation3], 1
    %s688 = scalar_lea.sflag [#allocation3], 1
    %689 = vsyncpa %s688, 1

</llo_original>
